<compile_context>
chip_gen: v6e
topology: v6e:2x2x1
jax: 0.10.0
libtpu: 0.0.40
codegen_flags: <defaults>
</compile_context>

<pallas_src>
import functools

import jax
import jax.numpy as jnp
from jax import lax
from jax.experimental import pallas as pl
from jax.experimental.pallas import tpu as pltpu

# Small shapes consistent with the module: x is [B, hidden, seq_len] (PyTorch NCL).
# B*L = 128 gives a full lane-dense vreg row (perf-review amortization item).
B = 4
HIDDEN = 32
SEQ_LEN = 32
EPS = 1e-5


# ---------------------------------------------------------------------------
# Fused ResBlockG kernel (works on the lane-dense [H, B*L] slab)
#   x_ref            : [H, N]   N = B*L, channels on sublanes, (b, l) on lanes
#   w1_ref / w2_ref  : [H, 3H]  bf16 fused tap weights (cols = [x[l-1] | x[l] | x[l+1]])
#   b2_ref           : [H, 1]   conv2 bias (conv1 bias cancelled by BN2, see above)
#   g*_ref / be*_ref : [H, 1]   BN gamma / beta
#   out_ref          : [H, N]
# ---------------------------------------------------------------------------
def resblockg_kernel(x_ref, w1_ref, g1_ref, be1_ref,
                     w2_ref, b2_ref, g2_ref, be2_ref, out_ref, *, seq_len):
    H, N = x_ref.shape
    L = seq_len
    inv_n = 1.0 / float(N)

    x = x_ref[...]                                               # [H, N] f32

    # Sequence-boundary masks for the zero-padded l+-1 taps (also kill the lane wrap
    # of the rotations and any cross-sequence leakage in the flattened layout).
    pos = lax.broadcasted_iota(jnp.int32, (1, N), 1) % L
    m_prev = (pos != 0).astype(jnp.float32)        # kills x[l-1] contribution at l == 0
    m_next = (pos != L - 1).astype(jnp.float32)    # kills x[l+1] contribution at l == L-1

    def bn_relu(v, gamma, beta):
        # BatchNorm1d (training mode), one-pass batch stats over all B*L positions,
        # affine folded into a single mul+add.
        s = jnp.sum(v, axis=1, keepdims=True)
        sq = jnp.sum(v * v, axis=1, keepdims=True)
        mean = s * inv_n
        var = jnp.maximum(sq * inv_n - mean * mean, 0.0)         # clamp: robustness
        a = lax.rsqrt(var + EPS) * gamma                         # [H, 1]
        c = beta - mean * a                                      # [H, 1]
        return jnp.maximum(v * a + c, 0.0)

    def conv3(v, w_fused, bias=None):
        # Conv1d(H, H, 3, padding=1): three taps fused into one MXU matmul
        # [H, 3H](bf16) x [3H, N](bf16) -> f32.  The l+-1 inputs are XLU lane
        # rotations + boundary masks (no concat/slice copies, no shift matrices).
        v_prev = pltpu.roll(v, 1, axis=1) * m_prev               # v_prev[:, j] = v[:, j-1]
        v_next = pltpu.roll(v, N - 1, axis=1) * m_next           # v_next[:, j] = v[:, j+1]
        cat = jnp.concatenate([v_prev, v, v_next], axis=0)       # [3H, N] f32
        out = jnp.dot(w_fused, cat.astype(jnp.bfloat16),
                      preferred_element_type=jnp.float32)        # MXU, f32 accum
        if bias is not None:
            out = out + bias
        return out
        # TODO(synk): per perf review, also try w0@v_prev + w1@v + w2@v_next (three
        # accumulating dots, no [3H,N] staging concat) and keep whichever bundle dump
        # shows fewer vld/vst.

    r = bn_relu(x, g1_ref[...], be1_ref[...])
    r = conv3(r, w1_ref[...])                      # conv1 bias exactly cancelled by BN2
    r = bn_relu(r, g2_ref[...], be2_ref[...])
    r = conv3(r, w2_ref[...], b2_ref[...])
    out_ref[...] = x + r                           # identity bypass, one 128-lane store


# ---------------------------------------------------------------------------
# Wrapper: NCL in / NCL out; the lane-dense repack is plain XLA layout plumbing.
# ---------------------------------------------------------------------------
@jax.jit
def resblock_g(x, params):
    Bn, H, L = x.shape
    N = Bn * L
    x2 = jnp.transpose(x, (1, 0, 2)).reshape(H, N)               # [H, B*L]

    flops = 2 * (2 * H * 3 * H * N) + 12 * H * N                 # 2 convs + elementwise
    bytes_accessed = (2 * H * N * 4                               # x in + y out (f32)
                      + 2 * H * 3 * H * 2                         # bf16 weights
                      + 5 * H * 4)                                # biases / gamma / beta
    vmem = functools.partial(pl.BlockSpec, memory_space=pltpu.MemorySpace.VMEM)

    y2 = pl.pallas_call(
        functools.partial(resblockg_kernel, seq_len=L),
        out_shape=jax.ShapeDtypeStruct((H, N), jnp.float32),
        in_specs=[vmem()] * 8,
        out_specs=vmem(),
        cost_estimate=pl.CostEstimate(flops=flops,
                                      transcendentals=2 * H,      # rsqrt per channel, 2 BNs
                                      bytes_accessed=bytes_accessed),
    )(x2,
      params["w1_fused"], params["g1"], params["beta1"],
      params["w2_fused"], params["b2"], params["g2"], params["beta2"])

    return jnp.transpose(y2.reshape(H, Bn, L), (1, 0, 2))
    # TODO(synk): for large B*L, add a "parallel" grid over position tiles (>=256 lanes
    # per tile) with per-tile BN partial sums combined in an "arbitrary" phase, and
    # re-derive the tile/VMEM budget (vmem_limit_bytes) for v7x's 64 MiB VMEM / 2 TCs.


# ---------------------------------------------------------------------------
# Parameter init (mirrors the torch init schemes & shapes)
# ---------------------------------------------------------------------------
def init_params(key):
    ks = jax.random.split(key, 4)
    fan = HIDDEN * 3                         # Cin * kernel_size
    xav_bound = (6.0 / (fan + fan)) ** 0.5   # xavier_uniform, gain=1
    bias_bound = 1.0 / (fan ** 0.5)          # default Conv1d bias init

    def u(k, shape, bound):
        return jax.random.uniform(k, shape, jnp.float32, -bound, bound)

    w1 = u(ks[0], (HIDDEN, HIDDEN, 3), xav_bound)   # [Cout, Cin, K] (torch layout)
    w2 = u(ks[1], (HIDDEN, HIDDEN, 3), xav_bound)
    b1 = u(ks[2], (HIDDEN,), bias_bound)
    b2 = u(ks[3], (HIDDEN,), bias_bound)

    def fuse(w):  # [Cout, Cin, K] -> [Cout, K*Cin], column blocks = [x[l-1] | x[l] | x[l+1]]
        return jnp.concatenate([w[:, :, 0], w[:, :, 1], w[:, :, 2]],
                               axis=1).astype(jnp.bfloat16)       # bf16 MXU operands

    col = lambda a: a.reshape(HIDDEN, 1)
    ones = jnp.ones((HIDDEN,), jnp.float32)
    zeros = jnp.zeros((HIDDEN,), jnp.float32)

    return dict(
        # torch-native tensors (used only by the pure-JAX reference)
        w1_raw=w1, w2_raw=w2, b1_raw=b1, b2_raw=b2,
        # kernel-layout tensors (conv1 bias intentionally not passed to the kernel)
        w1_fused=fuse(w1), w2_fused=fuse(w2),
        b2=col(b2),
        g1=col(ones), beta1=col(zeros),
        g2=col(ones), beta2=col(zeros),
    )


# ---------------------------------------------------------------------------
# Pure-JAX reference (full f32, for correctness check)
# ---------------------------------------------------------------------------
def ref_resblockg(x, params):
    def bn_relu(v, g, be):
        mean = jnp.mean(v, axis=(0, 2), keepdims=True)
        var = jnp.mean((v - mean) ** 2, axis=(0, 2), keepdims=True)
        y = (v - mean) / jnp.sqrt(var + EPS) * g.reshape(1, -1, 1) + be.reshape(1, -1, 1)
        return jnp.maximum(y, 0.0)

    def conv3(v, w, b):
        y = lax.conv_general_dilated(
            v, w, window_strides=(1,), padding=((1, 1),),
            dimension_numbers=("NCH", "OIH", "NCH"),
            precision=lax.Precision.HIGHEST)
        return y + b.reshape(1, -1, 1)

    r = bn_relu(x, params["g1"], params["beta1"])
    r = conv3(r, params["w1_raw"], params["b1_raw"])
    r = bn_relu(r, params["g2"], params["beta2"])
    r = conv3(r, params["w2_raw"], params["b2_raw"])
    return x + r


if __name__ == "__main__":
    key = jax.random.PRNGKey(0)
    k_x, k_p = jax.random.split(key)

    params = init_params(k_p)
    x = jax.random.normal(k_x, (B, HIDDEN, SEQ_LEN), jnp.float32)

    out = jax.block_until_ready(resblock_g(x, params))

    assert out.shape == (B, HIDDEN, SEQ_LEN), out.shape
    assert bool(jnp.all(jnp.isfinite(out)))
    ref = ref_resblockg(x, params)
    err = float(jnp.max(jnp.abs(out - ref)))
    # 2e-2 budget covers the bf16 MXU operands (two K=96 contractions) vs the f32 ref.
    assert err < 2e-2, f"max abs err vs reference: {err}"
    print("KERNEL_OK")
</pallas_src>

<mosaic_0001>
module attributes {stable_mosaic.version = 11 : i64} {
  func.func @resblockg_kernel(%arg0: memref<32x128xf32, #tpu.memory_space<vmem>>, %arg1: memref<32x96xbf16, #tpu.memory_space<vmem>>, %arg2: memref<32x1xf32, #tpu.memory_space<vmem>>, %arg3: memref<32x1xf32, #tpu.memory_space<vmem>>, %arg4: memref<32x96xbf16, #tpu.memory_space<vmem>>, %arg5: memref<32x1xf32, #tpu.memory_space<vmem>>, %arg6: memref<32x1xf32, #tpu.memory_space<vmem>>, %arg7: memref<32x1xf32, #tpu.memory_space<vmem>>, %arg8: memref<32x128xf32, #tpu.memory_space<vmem>>) attributes {dimension_semantics = [], scalar_prefetch = 0 : i64, scratch_operands = 0 : i64, tpu.core_type = #tpu.core_type<tc>} {
    %c0 = arith.constant 0 : index
    %c0_0 = arith.constant 0 : index
    %0 = vector.load %arg0[%c0, %c0_0] : memref<32x128xf32, #tpu.memory_space<vmem>>, vector<32x128xf32>
    %1 = tpu.iota {dimensions = array<i32: 1>} : vector<1x128xi32>
    %c32_i32 = arith.constant 32 : i32
    %c0_i32 = arith.constant 0 : i32
    %2 = arith.cmpi eq, %c32_i32, %c0_i32 : i32
    %c1_i32 = arith.constant 1 : i32
    %3 = arith.select %2, %c1_i32, %c32_i32 : i32
    %4 = vector.broadcast %3 : i32 to vector<1x128xi32>
    %5 = arith.remsi %1, %4 : vector<1x128xi32>
    %c0_i32_1 = arith.constant 0 : i32
    %6 = vector.broadcast %c0_i32_1 : i32 to vector<1x128xi32>
    %7 = arith.cmpi ne, %5, %6 : vector<1x128xi32>
    %c0_i32_2 = arith.constant 0 : i32
    %8 = vector.broadcast %c0_i32_2 : i32 to vector<1x128xi32>
    %9 = arith.cmpi slt, %5, %8 : vector<1x128xi32>
    %c0_i32_3 = arith.constant 0 : i32
    %10 = arith.cmpi slt, %3, %c0_i32_3 : i32
    %11 = vector.broadcast %10 : i1 to vector<1x128xi1>
    %12 = vector.broadcast %11 : vector<1x128xi1> to vector<1x128xi1>
    %13 = arith.xori %9, %12 : vector<1x128xi1>
    %14 = arith.andi %13, %7 : vector<1x128xi1>
    %15 = vector.broadcast %3 : i32 to vector<1x128xi32>
    %16 = arith.addi %5, %15 : vector<1x128xi32>
    %17 = arith.select %14, %16, %5 : vector<1x128xi1>, vector<1x128xi32>
    %c0_i32_4 = arith.constant 0 : i32
    %18 = vector.broadcast %c0_i32_4 : i32 to vector<1x128xi32>
    %19 = arith.cmpi ne, %17, %18 : vector<1x128xi32>
    %20 = arith.extui %19 : vector<1x128xi1> to vector<1x128xi32>
    %21 = arith.sitofp %20 : vector<1x128xi32> to vector<1x128xf32>
    %c31_i32 = arith.constant 31 : i32
    %22 = vector.broadcast %c31_i32 : i32 to vector<1x128xi32>
    %23 = arith.cmpi ne, %17, %22 : vector<1x128xi32>
    %24 = arith.extui %23 : vector<1x128xi1> to vector<1x128xi32>
    %25 = arith.sitofp %24 : vector<1x128xi32> to vector<1x128xf32>
    %c0_5 = arith.constant 0 : index
    %c0_6 = arith.constant 0 : index
    %26 = vector.load %arg2[%c0_5, %c0_6] : memref<32x1xf32, #tpu.memory_space<vmem>>, vector<32x1xf32>
    %c0_7 = arith.constant 0 : index
    %c0_8 = arith.constant 0 : index
    %27 = vector.load %arg3[%c0_7, %c0_8] : memref<32x1xf32, #tpu.memory_space<vmem>>, vector<32x1xf32>
    %cst = arith.constant dense<0.000000e+00> : vector<32xf32>
    %28 = vector.multi_reduction <add>, %0, %cst [1] : vector<32x128xf32> to vector<32xf32>
    %29 = vector.shape_cast %28 : vector<32xf32> to vector<32x1xf32>
    %30 = arith.mulf %0, %0 : vector<32x128xf32>
    %cst_9 = arith.constant dense<0.000000e+00> : vector<32xf32>
    %31 = vector.multi_reduction <add>, %30, %cst_9 [1] : vector<32x128xf32> to vector<32xf32>
    %32 = vector.shape_cast %31 : vector<32xf32> to vector<32x1xf32>
    %cst_10 = arith.constant 7.812500e-03 : f32
    %33 = vector.broadcast %cst_10 : f32 to vector<32x1xf32>
    %34 = arith.mulf %29, %33 : vector<32x1xf32>
    %cst_11 = arith.constant 7.812500e-03 : f32
    %35 = vector.broadcast %cst_11 : f32 to vector<32x1xf32>
    %36 = arith.mulf %32, %35 : vector<32x1xf32>
    %37 = arith.mulf %34, %34 : vector<32x1xf32>
    %38 = arith.subf %36, %37 : vector<32x1xf32>
    %cst_12 = arith.constant 0.000000e+00 : f32
    %39 = vector.broadcast %cst_12 : f32 to vector<32x1xf32>
    %40 = arith.maximumf %38, %39 : vector<32x1xf32>
    %cst_13 = arith.constant 9.99999974E-6 : f32
    %41 = vector.broadcast %cst_13 : f32 to vector<32x1xf32>
    %42 = arith.addf %40, %41 : vector<32x1xf32>
    %43 = math.rsqrt %42 : vector<32x1xf32>
    %44 = arith.mulf %43, %26 : vector<32x1xf32>
    %45 = arith.mulf %34, %44 : vector<32x1xf32>
    %46 = arith.subf %27, %45 : vector<32x1xf32>
    %47 = vector.broadcast %44 : vector<32x1xf32> to vector<32x128xf32>
    %48 = arith.mulf %0, %47 : vector<32x128xf32>
    %49 = vector.broadcast %46 : vector<32x1xf32> to vector<32x128xf32>
    %50 = arith.addf %48, %49 : vector<32x128xf32>
    %cst_14 = arith.constant 0.000000e+00 : f32
    %51 = vector.broadcast %cst_14 : f32 to vector<32x128xf32>
    %52 = arith.maximumf %50, %51 : vector<32x128xf32>
    %c0_15 = arith.constant 0 : index
    %c0_16 = arith.constant 0 : index
    %53 = vector.load %arg1[%c0_15, %c0_16] : memref<32x96xbf16, #tpu.memory_space<vmem>>, vector<32x96xbf16>
    %c1_i32_17 = arith.constant 1 : i32
    %54 = tpu.dynamic_rotate %52 by %c1_i32_17 dim 1 : vector<32x128xf32>, i32 -> vector<32x128xf32>
    %55 = vector.broadcast %21 : vector<1x128xf32> to vector<32x128xf32>
    %56 = arith.mulf %54, %55 : vector<32x128xf32>
    %c127_i32 = arith.constant 127 : i32
    %57 = tpu.dynamic_rotate %52 by %c127_i32 dim 1 : vector<32x128xf32>, i32 -> vector<32x128xf32>
    %58 = vector.broadcast %25 : vector<1x128xf32> to vector<32x128xf32>
    %59 = arith.mulf %57, %58 : vector<32x128xf32>
    %60 = tpu.concatenate %56, %52, %59 in 0 : vector<32x128xf32>, vector<32x128xf32>, vector<32x128xf32> -> vector<96x128xf32>
    %61 = arith.truncf %60 : vector<96x128xf32> to vector<96x128xbf16>
    %cst_18 = arith.constant dense<0.000000e+00> : vector<32x128xf32>
    %62 = tpu.matmul %53, %61, %cst_18 {dimension_numbers = #tpu.dot_dimension_numbers<[1], [0], [0], [1], [0, 0, 1, 1], [], []>} : vector<32x96xbf16>, vector<96x128xbf16>, vector<32x128xf32> -> vector<32x128xf32>
    %c0_19 = arith.constant 0 : index
    %c0_20 = arith.constant 0 : index
    %63 = vector.load %arg6[%c0_19, %c0_20] : memref<32x1xf32, #tpu.memory_space<vmem>>, vector<32x1xf32>
    %c0_21 = arith.constant 0 : index
    %c0_22 = arith.constant 0 : index
    %64 = vector.load %arg7[%c0_21, %c0_22] : memref<32x1xf32, #tpu.memory_space<vmem>>, vector<32x1xf32>
    %cst_23 = arith.constant dense<0.000000e+00> : vector<32xf32>
    %65 = vector.multi_reduction <add>, %62, %cst_23 [1] : vector<32x128xf32> to vector<32xf32>
    %66 = vector.shape_cast %65 : vector<32xf32> to vector<32x1xf32>
    %67 = arith.mulf %62, %62 : vector<32x128xf32>
    %cst_24 = arith.constant dense<0.000000e+00> : vector<32xf32>
    %68 = vector.multi_reduction <add>, %67, %cst_24 [1] : vector<32x128xf32> to vector<32xf32>
    %69 = vector.shape_cast %68 : vector<32xf32> to vector<32x1xf32>
    %cst_25 = arith.constant 7.812500e-03 : f32
    %70 = vector.broadcast %cst_25 : f32 to vector<32x1xf32>
    %71 = arith.mulf %66, %70 : vector<32x1xf32>
    %cst_26 = arith.constant 7.812500e-03 : f32
    %72 = vector.broadcast %cst_26 : f32 to vector<32x1xf32>
    %73 = arith.mulf %69, %72 : vector<32x1xf32>
    %74 = arith.mulf %71, %71 : vector<32x1xf32>
    %75 = arith.subf %73, %74 : vector<32x1xf32>
    %cst_27 = arith.constant 0.000000e+00 : f32
    %76 = vector.broadcast %cst_27 : f32 to vector<32x1xf32>
    %77 = arith.maximumf %75, %76 : vector<32x1xf32>
    %cst_28 = arith.constant 9.99999974E-6 : f32
    %78 = vector.broadcast %cst_28 : f32 to vector<32x1xf32>
    %79 = arith.addf %77, %78 : vector<32x1xf32>
    %80 = math.rsqrt %79 : vector<32x1xf32>
    %81 = arith.mulf %80, %63 : vector<32x1xf32>
    %82 = arith.mulf %71, %81 : vector<32x1xf32>
    %83 = arith.subf %64, %82 : vector<32x1xf32>
    %84 = vector.broadcast %81 : vector<32x1xf32> to vector<32x128xf32>
    %85 = arith.mulf %62, %84 : vector<32x128xf32>
    %86 = vector.broadcast %83 : vector<32x1xf32> to vector<32x128xf32>
    %87 = arith.addf %85, %86 : vector<32x128xf32>
    %cst_29 = arith.constant 0.000000e+00 : f32
    %88 = vector.broadcast %cst_29 : f32 to vector<32x128xf32>
    %89 = arith.maximumf %87, %88 : vector<32x128xf32>
    %c0_30 = arith.constant 0 : index
    %c0_31 = arith.constant 0 : index
    %90 = vector.load %arg4[%c0_30, %c0_31] : memref<32x96xbf16, #tpu.memory_space<vmem>>, vector<32x96xbf16>
    %c0_32 = arith.constant 0 : index
    %c0_33 = arith.constant 0 : index
    %91 = vector.load %arg5[%c0_32, %c0_33] : memref<32x1xf32, #tpu.memory_space<vmem>>, vector<32x1xf32>
    %c1_i32_34 = arith.constant 1 : i32
    %92 = tpu.dynamic_rotate %89 by %c1_i32_34 dim 1 : vector<32x128xf32>, i32 -> vector<32x128xf32>
    %93 = vector.broadcast %21 : vector<1x128xf32> to vector<32x128xf32>
    %94 = arith.mulf %92, %93 : vector<32x128xf32>
    %c127_i32_35 = arith.constant 127 : i32
    %95 = tpu.dynamic_rotate %89 by %c127_i32_35 dim 1 : vector<32x128xf32>, i32 -> vector<32x128xf32>
    %96 = vector.broadcast %25 : vector<1x128xf32> to vector<32x128xf32>
    %97 = arith.mulf %95, %96 : vector<32x128xf32>
    %98 = tpu.concatenate %94, %89, %97 in 0 : vector<32x128xf32>, vector<32x128xf32>, vector<32x128xf32> -> vector<96x128xf32>
    %99 = arith.truncf %98 : vector<96x128xf32> to vector<96x128xbf16>
    %cst_36 = arith.constant dense<0.000000e+00> : vector<32x128xf32>
    %100 = tpu.matmul %90, %99, %cst_36 {dimension_numbers = #tpu.dot_dimension_numbers<[1], [0], [0], [1], [0, 0, 1, 1], [], []>} : vector<32x96xbf16>, vector<96x128xbf16>, vector<32x128xf32> -> vector<32x128xf32>
    %101 = vector.broadcast %91 : vector<32x1xf32> to vector<32x128xf32>
    %102 = arith.addf %100, %101 : vector<32x128xf32>
    %103 = arith.addf %0, %102 : vector<32x128xf32>
    %c0_37 = arith.constant 0 : index
    %c0_38 = arith.constant 0 : index
    %104 = vector.load %arg8[%c0_37, %c0_38] : memref<32x128xf32, #tpu.memory_space<vmem>>, vector<32x128xf32>
    tpu.vector_store %arg8[%c0_37, %c0_38], %103 {strides = array<i32>} : memref<32x128xf32, #tpu.memory_space<vmem>>, vector<32x128xf32>,
    return
  }
}

</mosaic_0001>

<llo_original>
// kernel: resblock_g.1
$region0: #{resblock_g.1}
  #allocation0 [shape = 'u32[]', space=smem, size = 0x4, offset = 0x4, fixed_abs, tag = 'smem constant byte address 0x4 - core index']
  #allocation1 [shape = 'u32[144,128]{1,0:T(1,128)}', space=vmem, size = 0x12000, scoped, tag = 'internal scratch']
  %s0 = inlined_call_operand.vmem [shape: f32[32,128], index: 0, kind: input, shape index: {}]
  %s1 = inlined_call_operand.vmem [shape: bf16[32,96], index: 1, kind: input, shape index: {}]
  %s2 = inlined_call_operand.vmem [shape: f32[32,1], index: 2, kind: input, shape index: {}]
  %s3 = inlined_call_operand.vmem [shape: f32[32,1], index: 3, kind: input, shape index: {}]
  %s4 = inlined_call_operand.vmem [shape: bf16[32,96], index: 4, kind: input, shape index: {}]
  %s5 = inlined_call_operand.vmem [shape: f32[32,1], index: 5, kind: input, shape index: {}]
  %s6 = inlined_call_operand.vmem [shape: f32[32,1], index: 6, kind: input, shape index: {}]
  %s7 = inlined_call_operand.vmem [shape: f32[32,1], index: 7, kind: input, shape index: {}]
  %s8 = inlined_call_operand.vmem [shape: f32[32,128], index: 8, kind: output, shape index: {}]
  %s9 = sld [smem:[#allocation0]]
  $region42: #{resblock_g.1} parent=0
    _
  %s11 = ssub.s32 1, %s9
  %s12 = scalar_select 0, %s11, %s9
  // Predicated region
  $region2: #{resblock_g.1} parent=0 // pred_check
    _
  $region3: #{resblock_g.1} parent=0 // pred_check_branch
    %14 = sbr.rel (0) target = $region5
  $region4: #{resblock_g.1} parent=0 // pred_region
    _
  $region5: #{resblock_g.1} parent=0 // pred_fallthru
    _
  // Predicated region
  $region6: #{resblock_g.1} parent=0 // pred_check
    _
  $region7: #{resblock_g.1} parent=0 // pred_check_branch
    %16 = sbr.rel (0) target = $region9
  $region8: #{resblock_g.1} parent=0 // pred_region
    _
  $region9: #{resblock_g.1} parent=0 // pred_fallthru
    _
  // Predicated region
  $region10: #{resblock_g.1} parent=0 // pred_check
    _
  $region11: #{resblock_g.1} parent=0 // pred_check_branch
    %18 = sbr.rel (0) target = $region13
  $region12: #{resblock_g.1} parent=0 // pred_region
    _
  $region13: #{resblock_g.1} parent=0 // pred_fallthru
    _
  // Predicated region
  $region14: #{resblock_g.1} parent=0 // pred_check
    _
  $region15: #{resblock_g.1} parent=0 // pred_check_branch
    %20 = sbr.rel (0) target = $region17
  $region16: #{resblock_g.1} parent=0 // pred_region
    _
  $region17: #{resblock_g.1} parent=0 // pred_fallthru
    _
  // Predicated region
  $region18: #{resblock_g.1} parent=0 // pred_check
    _
  $region19: #{resblock_g.1} parent=0 // pred_check_branch
    %22 = sbr.rel (0) target = $region21
  $region20: #{resblock_g.1} parent=0 // pred_region
    _
  $region21: #{resblock_g.1} parent=0 // pred_fallthru
    _
  // Predicated region
  $region22: #{resblock_g.1} parent=0 // pred_check
    _
  $region23: #{resblock_g.1} parent=0 // pred_check_branch
    %24 = sbr.rel (0) target = $region25
  $region24: #{resblock_g.1} parent=0 // pred_region
    _
  $region25: #{resblock_g.1} parent=0 // pred_fallthru
    _
  // Predicated region
  $region26: #{resblock_g.1} parent=0 // pred_check
    _
  $region27: #{resblock_g.1} parent=0 // pred_check_branch
    %26 = sbr.rel (0) target = $region29
  $region28: #{resblock_g.1} parent=0 // pred_region
    _
  $region29: #{resblock_g.1} parent=0 // pred_fallthru
    _
  // Predicated region
  $region30: #{resblock_g.1} parent=0 // pred_check
    _
  $region31: #{resblock_g.1} parent=0 // pred_check_branch
    %28 = sbr.rel (0) target = $region33
  $region32: #{resblock_g.1} parent=0 // pred_region
    _
  $region33: #{resblock_g.1} parent=0 // pred_fallthru
    _
  %v30 = vld [vmem:[%s0] sm:$0xff]
  %v31 = vld [vmem:[%s0 + $0x8] sm:$0xff]
  %v32 = vld [vmem:[%s0 + $0x10] sm:$0xff]
  %v33 = vld [vmem:[%s0 + $0x18] sm:$0xff]
  %v34 = vlaneseq
  %v35 = vand.u32 %v34, 127
  %vm36 = vcmp.lt.s32.totalorder %v35, 0
  %v37 = vsub.s32 0, %v35
  %v38 = vsel %vm36, %v37, %v35
  %v39 = vshrl.u32 %v38, 5
  %v40 = vand.u32 %v38, 31
  %v41 = vsub.s32 0, %v40
  %v42 = vsel %vm36, %v41, %v40
  %vm43 = vcmp.ne.s32.totalorder %v42, 0
  %vm44 = vcmp.lt.s32.totalorder %v42, 0
  %vm45 = vmand %vm44, %vm43
  %v46 = vadd.s32 %v42, 32
  %v47 = vsel %vm45, %v46, %v42
  %vm48 = vcmp.ne.s32.totalorder %v47, 0
  %v49 = vsel %vm48, 1, 0
  %v50 = vcvt.s32.f32 %v49
  %vm51 = vcmp.ne.s32.totalorder %v47, 31
  %v52 = vsel %vm51, 1, 0
  %v53 = vcvt.s32.f32 %v52
  %v54 = vld [vmem:[%s2] sm:$0xff]
  %v55 = vld [vmem:[%s2 + $0x8] sm:$0xff]
  %v56 = vld [vmem:[%s2 + $0x10] sm:$0xff]
  %v57 = vld [vmem:[%s2 + $0x18] sm:$0xff]
  %v58 = vld [vmem:[%s3] sm:$0xff]
  %v59 = vld [vmem:[%s3 + $0x8] sm:$0xff]
  %v60 = vld [vmem:[%s3 + $0x10] sm:$0xff]
  %v61 = vld [vmem:[%s3 + $0x18] sm:$0xff]
  %62 = vadd.xlane.f32.xlu0 %v30
  %v63 = vpop.xlane.xlu0 %62
  %64 = vadd.xlane.f32.xlu0 %v31
  %v65 = vpop.xlane.xlu0 %64
  %66 = vadd.xlane.f32.xlu0 %v32
  %v67 = vpop.xlane.xlu0 %66
  %68 = vadd.xlane.f32.xlu0 %v33
  %v69 = vpop.xlane.xlu0 %68
  %v70 = vmul.f32 %v30, %v30
  %v71 = vmul.f32 %v31, %v31
  %v72 = vmul.f32 %v32, %v32
  %v73 = vmul.f32 %v33, %v33
  %74 = vadd.xlane.f32.xlu0 %v70
  %v75 = vpop.xlane.xlu0 %74
  %76 = vadd.xlane.f32.xlu0 %v71
  %v77 = vpop.xlane.xlu0 %76
  %78 = vadd.xlane.f32.xlu0 %v72
  %v79 = vpop.xlane.xlu0 %78
  %80 = vadd.xlane.f32.xlu0 %v73
  %v81 = vpop.xlane.xlu0 %80
  %v82 = vmul.f32 %v63, 0.0078125
  %v83 = vmul.f32 %v65, 0.0078125
  %v84 = vmul.f32 %v67, 0.0078125
  %v85 = vmul.f32 %v69, 0.0078125
  %v86 = vmul.f32 %v75, 0.0078125
  %v87 = vmul.f32 %v77, 0.0078125
  %v88 = vmul.f32 %v79, 0.0078125
  %v89 = vmul.f32 %v81, 0.0078125
  %v90 = vmul.f32 %v82, %v82
  %v91 = vmul.f32 %v83, %v83
  %v92 = vmul.f32 %v84, %v84
  %v93 = vmul.f32 %v85, %v85
  %v94 = vsub.f32 %v86, %v90
  %v95 = vsub.f32 %v87, %v91
  %v96 = vsub.f32 %v88, %v92
  %v97 = vsub.f32 %v89, %v93
  %v98 = vmax.f32 %v94, 0.0
  %v99 = vmax.f32 %v95, 0.0
  %v100 = vmax.f32 %v96, 0.0
  %v101 = vmax.f32 %v97, 0.0
  %v102 = vadd.f32 %v98, 1e-05
  %v103 = vadd.f32 %v99, 1e-05
  %v104 = vadd.f32 %v100, 1e-05
  %v105 = vadd.f32 %v101, 1e-05
  %v106 = vrsqrt.pop %v102
  %v107 = vrsqrt.pop %v103
  %v108 = vrsqrt.pop %v104
  %v109 = vrsqrt.pop %v105
  %v110 = vmul.f32 %v106, %v54
  %v111 = vmul.f32 %v107, %v55
  %v112 = vmul.f32 %v108, %v56
  %v113 = vmul.f32 %v109, %v57
  %v114 = vmul.f32 %v82, %v110
  %v115 = vmul.f32 %v83, %v111
  %v116 = vmul.f32 %v84, %v112
  %v117 = vmul.f32 %v85, %v113
  %v118 = vsub.f32 %v58, %v114
  %v119 = vsub.f32 %v59, %v115
  %v120 = vsub.f32 %v60, %v116
  %v121 = vsub.f32 %v61, %v117
  %123 = vset.pattern.permute.xlu0 0
  %124 = vperm.xlu0 %123, %v110
  %v125 = vpop.permute.xlu0 %124
  %128 = vset.pattern.permute.xlu0 0
  %129 = vperm.xlu0 %128, %v111
  %v130 = vpop.permute.xlu0 %129
  %133 = vset.pattern.permute.xlu0 0
  %134 = vperm.xlu0 %133, %v112
  %v135 = vpop.permute.xlu0 %134
  %138 = vset.pattern.permute.xlu0 0
  %139 = vperm.xlu0 %138, %v113
  %v140 = vpop.permute.xlu0 %139
  %v142 = vmul.f32 %v30, %v125
  %v143 = vmul.f32 %v31, %v130
  %v144 = vmul.f32 %v32, %v135
  %v145 = vmul.f32 %v33, %v140
  %147 = vset.pattern.permute.xlu0 0
  %148 = vperm.xlu0 %147, %v118
  %v149 = vpop.permute.xlu0 %148
  %152 = vset.pattern.permute.xlu0 0
  %153 = vperm.xlu0 %152, %v119
  %v154 = vpop.permute.xlu0 %153
  %157 = vset.pattern.permute.xlu0 0
  %158 = vperm.xlu0 %157, %v120
  %v159 = vpop.permute.xlu0 %158
  %162 = vset.pattern.permute.xlu0 0
  %163 = vperm.xlu0 %162, %v121
  %v164 = vpop.permute.xlu0 %163
  %v166 = vadd.f32 %v142, %v149
  %v167 = vadd.f32 %v143, %v154
  %v168 = vadd.f32 %v144, %v159
  %v169 = vadd.f32 %v145, %v164
  %v170 = vmax.f32 %v166, 0.0
  %v171 = vmax.f32 %v167, 0.0
  %v172 = vmax.f32 %v168, 0.0
  %v173 = vmax.f32 %v169, 0.0
  %v174 = vld [vmem:[%s1] sm:$0xf]
  %v175 = vld [vmem:[%s1 + $0x4] sm:$0xf]
  %v176 = vld [vmem:[%s1 + $0x8] sm:$0xf]
  %v177 = vld [vmem:[%s1 + $0xc] sm:$0xf]
  %178 = vrot.lane.b32.xlu0 %v170, 1
  %v179 = vpop.permute.xlu0 %178
  %180 = vrot.lane.b32.xlu0 %v171, 1
  %v181 = vpop.permute.xlu0 %180
  %182 = vrot.lane.b32.xlu0 %v172, 1
  %v183 = vpop.permute.xlu0 %182
  %184 = vrot.lane.b32.xlu0 %v173, 1
  %v185 = vpop.permute.xlu0 %184
  %v186 = vmul.f32 %v179, %v50
  %v187 = vmul.f32 %v181, %v50
  %v188 = vmul.f32 %v183, %v50
  %v189 = vmul.f32 %v185, %v50
  %190 = vrot.lane.b32.xlu0 %v170, 127
  %v191 = vpop.permute.xlu0 %190
  %192 = vrot.lane.b32.xlu0 %v171, 127
  %v193 = vpop.permute.xlu0 %192
  %194 = vrot.lane.b32.xlu0 %v172, 127
  %v195 = vpop.permute.xlu0 %194
  %196 = vrot.lane.b32.xlu0 %v173, 127
  %v197 = vpop.permute.xlu0 %196
  %v198 = vmul.f32 %v191, %v53
  %v199 = vmul.f32 %v193, %v53
  %v200 = vmul.f32 %v195, %v53
  %v201 = vmul.f32 %v197, %v53
  %v202 = vpack.c.bf16 %v187, %v186
  %v203 = vpack.c.bf16 %v189, %v188
  %v204 = vpack.c.bf16 %v171, %v170
  %v205 = vpack.c.bf16 %v173, %v172
  %v206 = vpack.c.bf16 %v199, %v198
  %v207 = vpack.c.bf16 %v201, %v200
  %v212 = vunpack.c.l.b16 %v174
  %v213 = vunpack.c.l.b16 %v175
  %v214 = vunpack.c.l.b16 %v176
  %v215 = vunpack.c.l.b16 %v177
  %v216 = vpack.c.b16 %v213, %v212
  %v217 = vpack.c.b16 %v215, %v214
  %vm218 = vcmask 785408
  %v220 = vsel %vm218, %v216, 0
  %v223 = vsel %vm218, %v217, 0
  %225 = vmatprep.subr.bf16.mxu0 0
  %226 = vmatpush1.bf16.msra.mxu0 0
  %227 = vmatprep.subr.bf16.mxu0 0
  %228 = vmatpush1.bf16.msra.mxu0 0
  %229 = vmatprep.subr.bf16.mxu0 0
  %230 = vmatpush1.bf16.msra.mxu0 %v207
  %231 = vmatprep.subr.bf16.mxu0 0
  %232 = vmatpush1.bf16.msra.mxu0 %v206
  %233 = vmatprep.subr.bf16.mxu0 0
  %234 = vmatpush1.bf16.msra.mxu0 %v205
  %235 = vmatprep.subr.bf16.mxu0 0
  %236 = vmatpush1.bf16.msra.mxu0 %v204
  %237 = vmatprep.subr.bf16.mxu0 0
  %238 = vmatpush1.bf16.msra.mxu0 %v203
  %239 = vmatprep.subr.bf16.mxu0 0
  %240 = vmatpush1.bf16.msra.mxu0 %v202
  %241 = vmatprep.subr.bf16.mxu0 0
  %242 = vmatpush2.bf16.msra.mxu0 0
  %243 = vmatprep.subr.bf16.mxu0 0
  %244 = vmatpush2.bf16.msra.mxu0 0
  %245 = vmatprep.subr.bf16.mxu0 0
  %246 = vmatpush2.bf16.msra.mxu0 0
  %247 = vmatprep.subr.bf16.mxu0 0
  %248 = vmatpush2.bf16.msra.mxu0 0
  %249 = vmatprep.subr.bf16.mxu0 0
  %250 = vmatpush2.bf16.msra.mxu0 0
  %251 = vmatprep.subr.bf16.mxu0 0
  %252 = vmatpush2.bf16.msra.mxu0 0
  %253 = vmatprep.subr.bf16.mxu0 0
  %254 = vmatpush2.bf16.msra.mxu0 0
  %255 = vmatprep.subr.bf16.mxu0 0
  %256 = vmatpush2.bf16.msra.mxu0 0
  %257 = vmatprep.mubr.bf16.mxu0 0
  %258 = vmatmul.mubr.bf16.gmra.mxu0 %v220
  %v259 = vpop.f32.mrf.mxu0
  %v260 = vadd.f32 0.0, %v259
  %v261 = vpop.f32.mrf.mxu0
  %v262 = vpop.f32.mrf.mxu0
  %v263 = vadd.f32 0.0, %v262
  %v264 = vpop.f32.mrf.mxu0
  %265 = vmatprep.mubr.bf16.mxu0 0
  %266 = vmatmul.mubr.bf16.gmra.mxu0 %v223
  %v267 = vpop.f32.mrf.mxu0
  %v268 = vadd.f32 0.0, %v267
  %v269 = vpop.f32.mrf.mxu0
  %v270 = vpop.f32.mrf.mxu0
  %v271 = vadd.f32 0.0, %v270
  %v272 = vpop.f32.mrf.mxu0
  %273 = vdwg.mxu0
  %v274 = vld [vmem:[%s6] sm:$0xff]
  %v275 = vld [vmem:[%s6 + $0x8] sm:$0xff]
  %v276 = vld [vmem:[%s6 + $0x10] sm:$0xff]
  %v277 = vld [vmem:[%s6 + $0x18] sm:$0xff]
  %v278 = vld [vmem:[%s7] sm:$0xff]
  %v279 = vld [vmem:[%s7 + $0x8] sm:$0xff]
  %v280 = vld [vmem:[%s7 + $0x10] sm:$0xff]
  %v281 = vld [vmem:[%s7 + $0x18] sm:$0xff]
  %282 = vadd.xlane.f32.xlu0 %v260
  %v283 = vpop.xlane.xlu0 %282
  %284 = vadd.xlane.f32.xlu0 %v263
  %v285 = vpop.xlane.xlu0 %284
  %286 = vadd.xlane.f32.xlu0 %v268
  %v287 = vpop.xlane.xlu0 %286
  %288 = vadd.xlane.f32.xlu0 %v271
  %v289 = vpop.xlane.xlu0 %288
  %v290 = vmul.f32 %v260, %v260
  %v291 = vmul.f32 %v263, %v263
  %v292 = vmul.f32 %v268, %v268
  %v293 = vmul.f32 %v271, %v271
  %294 = vadd.xlane.f32.xlu0 %v290
  %v295 = vpop.xlane.xlu0 %294
  %296 = vadd.xlane.f32.xlu0 %v291
  %v297 = vpop.xlane.xlu0 %296
  %298 = vadd.xlane.f32.xlu0 %v292
  %v299 = vpop.xlane.xlu0 %298
  %300 = vadd.xlane.f32.xlu0 %v293
  %v301 = vpop.xlane.xlu0 %300
  %v302 = vmul.f32 %v283, 0.0078125
  %v303 = vmul.f32 %v285, 0.0078125
  %v304 = vmul.f32 %v287, 0.0078125
  %v305 = vmul.f32 %v289, 0.0078125
  %v306 = vmul.f32 %v295, 0.0078125
  %v307 = vmul.f32 %v297, 0.0078125
  %v308 = vmul.f32 %v299, 0.0078125
  %v309 = vmul.f32 %v301, 0.0078125
  %v310 = vmul.f32 %v302, %v302
  %v311 = vmul.f32 %v303, %v303
  %v312 = vmul.f32 %v304, %v304
  %v313 = vmul.f32 %v305, %v305
  %v314 = vsub.f32 %v306, %v310
  %v315 = vsub.f32 %v307, %v311
  %v316 = vsub.f32 %v308, %v312
  %v317 = vsub.f32 %v309, %v313
  %v318 = vmax.f32 %v314, 0.0
  %v319 = vmax.f32 %v315, 0.0
  %v320 = vmax.f32 %v316, 0.0
  %v321 = vmax.f32 %v317, 0.0
  %v322 = vadd.f32 %v318, 1e-05
  %v323 = vadd.f32 %v319, 1e-05
  %v324 = vadd.f32 %v320, 1e-05
  %v325 = vadd.f32 %v321, 1e-05
  %v326 = vrsqrt.pop %v322
  %v327 = vrsqrt.pop %v323
  %v328 = vrsqrt.pop %v324
  %v329 = vrsqrt.pop %v325
  %v330 = vmul.f32 %v326, %v274
  %v331 = vmul.f32 %v327, %v275
  %v332 = vmul.f32 %v328, %v276
  %v333 = vmul.f32 %v329, %v277
  %v334 = vmul.f32 %v302, %v330
  %v335 = vmul.f32 %v303, %v331
  %v336 = vmul.f32 %v304, %v332
  %v337 = vmul.f32 %v305, %v333
  %v338 = vsub.f32 %v278, %v334
  %v339 = vsub.f32 %v279, %v335
  %v340 = vsub.f32 %v280, %v336
  %v341 = vsub.f32 %v281, %v337
  %343 = vset.pattern.permute.xlu0 0
  %344 = vperm.xlu0 %343, %v330
  %v345 = vpop.permute.xlu0 %344
  %348 = vset.pattern.permute.xlu0 0
  %349 = vperm.xlu0 %348, %v331
  %v350 = vpop.permute.xlu0 %349
  %353 = vset.pattern.permute.xlu0 0
  %354 = vperm.xlu0 %353, %v332
  %v355 = vpop.permute.xlu0 %354
  %358 = vset.pattern.permute.xlu0 0
  %359 = vperm.xlu0 %358, %v333
  %v360 = vpop.permute.xlu0 %359
  %v362 = vmul.f32 %v260, %v345
  %v363 = vmul.f32 %v263, %v350
  %v364 = vmul.f32 %v268, %v355
  %v365 = vmul.f32 %v271, %v360
  %367 = vset.pattern.permute.xlu0 0
  %368 = vperm.xlu0 %367, %v338
  %v369 = vpop.permute.xlu0 %368
  %372 = vset.pattern.permute.xlu0 0
  %373 = vperm.xlu0 %372, %v339
  %v374 = vpop.permute.xlu0 %373
  %377 = vset.pattern.permute.xlu0 0
  %378 = vperm.xlu0 %377, %v340
  %v379 = vpop.permute.xlu0 %378
  %382 = vset.pattern.permute.xlu0 0
  %383 = vperm.xlu0 %382, %v341
  %v384 = vpop.permute.xlu0 %383
  %v386 = vadd.f32 %v362, %v369
  %v387 = vadd.f32 %v363, %v374
  %v388 = vadd.f32 %v364, %v379
  %v389 = vadd.f32 %v365, %v384
  %v390 = vmax.f32 %v386, 0.0
  %v391 = vmax.f32 %v387, 0.0
  %v392 = vmax.f32 %v388, 0.0
  %v393 = vmax.f32 %v389, 0.0
  %v394 = vld [vmem:[%s4] sm:$0xf]
  %v395 = vld [vmem:[%s4 + $0x4] sm:$0xf]
  %v396 = vld [vmem:[%s4 + $0x8] sm:$0xf]
  %v397 = vld [vmem:[%s4 + $0xc] sm:$0xf]
  %v398 = vld [vmem:[%s5] sm:$0xff]
  %v399 = vld [vmem:[%s5 + $0x8] sm:$0xff]
  %v400 = vld [vmem:[%s5 + $0x10] sm:$0xff]
  %v401 = vld [vmem:[%s5 + $0x18] sm:$0xff]
  %402 = vrot.lane.b32.xlu0 %v390, 1
  %v403 = vpop.permute.xlu0 %402
  %404 = vrot.lane.b32.xlu0 %v391, 1
  %v405 = vpop.permute.xlu0 %404
  %406 = vrot.lane.b32.xlu0 %v392, 1
  %v407 = vpop.permute.xlu0 %406
  %408 = vrot.lane.b32.xlu0 %v393, 1
  %v409 = vpop.permute.xlu0 %408
  %v410 = vmul.f32 %v403, %v50
  %v411 = vmul.f32 %v405, %v50
  %v412 = vmul.f32 %v407, %v50
  %v413 = vmul.f32 %v409, %v50
  %414 = vrot.lane.b32.xlu0 %v390, 127
  %v415 = vpop.permute.xlu0 %414
  %416 = vrot.lane.b32.xlu0 %v391, 127
  %v417 = vpop.permute.xlu0 %416
  %418 = vrot.lane.b32.xlu0 %v392, 127
  %v419 = vpop.permute.xlu0 %418
  %420 = vrot.lane.b32.xlu0 %v393, 127
  %v421 = vpop.permute.xlu0 %420
  %v422 = vmul.f32 %v415, %v53
  %v423 = vmul.f32 %v417, %v53
  %v424 = vmul.f32 %v419, %v53
  %v425 = vmul.f32 %v421, %v53
  %v426 = vpack.c.bf16 %v411, %v410
  %v427 = vpack.c.bf16 %v413, %v412
  %v428 = vpack.c.bf16 %v391, %v390
  %v429 = vpack.c.bf16 %v393, %v392
  %v430 = vpack.c.bf16 %v423, %v422
  %v431 = vpack.c.bf16 %v425, %v424
  %433 = vset.pattern.permute.xlu0 0
  %434 = vperm.xlu0 %433, %v398
  %v435 = vpop.permute.xlu0 %434
  %438 = vset.pattern.permute.xlu0 0
  %439 = vperm.xlu0 %438, %v399
  %v440 = vpop.permute.xlu0 %439
  %443 = vset.pattern.permute.xlu0 0
  %444 = vperm.xlu0 %443, %v400
  %v445 = vpop.permute.xlu0 %444
  %448 = vset.pattern.permute.xlu0 0
  %449 = vperm.xlu0 %448, %v401
  %v450 = vpop.permute.xlu0 %449
  %v456 = vunpack.c.l.b16 %v394
  %v457 = vunpack.c.l.b16 %v395
  %v458 = vunpack.c.l.b16 %v396
  %v459 = vunpack.c.l.b16 %v397
  %v460 = vpack.c.b16 %v457, %v456
  %v461 = vpack.c.b16 %v459, %v458
  %v463 = vsel %vm218, %v460, 0
  %v466 = vsel %vm218, %v461, 0
  %468 = vmatprep.subr.bf16.mxu0 0
  %469 = vmatpush1.bf16.msra.mxu0 0
  %470 = vmatprep.subr.bf16.mxu0 0
  %471 = vmatpush1.bf16.msra.mxu0 0
  %472 = vmatprep.subr.bf16.mxu0 0
  %473 = vmatpush1.bf16.msra.mxu0 %v431
  %474 = vmatprep.subr.bf16.mxu0 0
  %475 = vmatpush1.bf16.msra.mxu0 %v430
  %476 = vmatprep.subr.bf16.mxu0 0
  %477 = vmatpush1.bf16.msra.mxu0 %v429
  %478 = vmatprep.subr.bf16.mxu0 0
  %479 = vmatpush1.bf16.msra.mxu0 %v428
  %480 = vmatprep.subr.bf16.mxu0 0
  %481 = vmatpush1.bf16.msra.mxu0 %v427
  %482 = vmatprep.subr.bf16.mxu0 0
  %483 = vmatpush1.bf16.msra.mxu0 %v426
  %484 = vmatprep.subr.bf16.mxu0 0
  %485 = vmatpush2.bf16.msra.mxu0 0
  %486 = vmatprep.subr.bf16.mxu0 0
  %487 = vmatpush2.bf16.msra.mxu0 0
  %488 = vmatprep.subr.bf16.mxu0 0
  %489 = vmatpush2.bf16.msra.mxu0 0
  %490 = vmatprep.subr.bf16.mxu0 0
  %491 = vmatpush2.bf16.msra.mxu0 0
  %492 = vmatprep.subr.bf16.mxu0 0
  %493 = vmatpush2.bf16.msra.mxu0 0
  %494 = vmatprep.subr.bf16.mxu0 0
  %495 = vmatpush2.bf16.msra.mxu0 0
  %496 = vmatprep.subr.bf16.mxu0 0
  %497 = vmatpush2.bf16.msra.mxu0 0
  %498 = vmatprep.subr.bf16.mxu0 0
  %499 = vmatpush2.bf16.msra.mxu0 0
  %500 = vmatprep.mubr.bf16.mxu0 0
  %501 = vmatmul.mubr.bf16.gmra.mxu0 %v463
  %v502 = vpop.f32.mrf.mxu0
  %v503 = vadd.f32 %v435, %v502
  %v504 = vpop.f32.mrf.mxu0
  %v505 = vpop.f32.mrf.mxu0
  %v506 = vadd.f32 %v440, %v505
  %v507 = vpop.f32.mrf.mxu0
  %508 = vmatprep.mubr.bf16.mxu0 0
  %509 = vmatmul.mubr.bf16.gmra.mxu0 %v466
  %v510 = vpop.f32.mrf.mxu0
  %v511 = vadd.f32 %v445, %v510
  %v512 = vpop.f32.mrf.mxu0
  %v513 = vpop.f32.mrf.mxu0
  %v514 = vadd.f32 %v450, %v513
  %v515 = vpop.f32.mrf.mxu0
  %516 = vdwg.mxu0
  %v517 = vadd.f32 %v30, %v503
  %v518 = vadd.f32 %v31, %v506
  %v519 = vadd.f32 %v32, %v511
  %v520 = vadd.f32 %v33, %v514
  %521 = vst [vmem:[%s8] sm:$0xff] %v517
  %522 = vst [vmem:[%s8 + $0x8] sm:$0xff] %v518
  %523 = vst [vmem:[%s8 + $0x10] sm:$0xff] %v519
  %524 = vst [vmem:[%s8 + $0x18] sm:$0xff] %v520
  // Predicated region
  $region34: #{resblock_g.1} parent=0 // pred_check
    _
  $region35: #{resblock_g.1} parent=0 // pred_check_branch
    %526 = sbr.rel (0) target = $region37
  $region36: #{resblock_g.1} parent=0 // pred_region
    _
  $region37: #{resblock_g.1} parent=0 // pred_fallthru
    _
  // Predicated region
  $region38: #{resblock_g.1} parent=0 // pred_check
    _
  $region39: #{resblock_g.1} parent=0 // pred_check_branch
    %528 = sbr.rel (0) target = $region41
  $region40: #{resblock_g.1} parent=0 // pred_region
    _
  $region41: #{resblock_g.1} parent=0 // pred_fallthru
    _

</llo_original>
